<compile_context>
chip_gen: v7x
topology: tpu7x:2x2x1
jax: 0.10.0
libtpu: 0.0.40
codegen_flags: <defaults>
</compile_context>

<pallas_src>
import functools

import jax
import jax.numpy as jnp
from jax import lax
from jax.experimental import pallas as pl
from jax.experimental.pallas import tpu as pltpu


def _spatial_softmax_kernel(x_ref, mesh_ref, o_u_ref, o_v_ref,
                            *, thw, hw, slice_mesh, needs_mask):
    # x_ref:    (tb, c, thw)   input tile (native dtype)
    # mesh_ref: (2, hw_pad) resident coordinate table (row 0 = u, row 1 = v),
    #           or (2, thw) per-chunk block when slice_mesh is False and n_s > 1.
    # o_u_ref:  (tb, c, 1) f32  E[u] (resident across the spatial axis, used as accumulator)
    # o_v_ref:  (tb, c, 1) f32  E[v]
    si = pl.program_id(1)

    @pl.when(si == 0)
    def _init():
        o_u_ref[...] = jnp.zeros_like(o_u_ref)
        o_v_ref[...] = jnp.zeros_like(o_v_ref)

    # Cast to f32 in-kernel (bf16 inputs read half the HBM bytes).
    x = x_ref[...].astype(jnp.float32)                     # (tb, c, thw)

    # Numerically-stable softmax over the channel axis (axis=1), fully batched.
    m = jnp.max(x, axis=1, keepdims=True)                  # (tb, 1, thw)
    e = jnp.exp(x - m)                                     # (tb, c, thw)
    denom = jnp.sum(e, axis=1, keepdims=True)              # (tb, 1, thw)
    p = e * pl.reciprocal(denom, approx=False)             # (tb, c, thw)

    if needs_mask:
        # Tail block of the spatial axis: zero the probabilities of out-of-range
        # positions with a select (garbage there may be NaN/Inf; 0*garbage is not safe).
        lane = lax.broadcasted_iota(jnp.int32, (1, 1, thw), 2)
        valid = (si * thw + lane) < hw
        p = jnp.where(valid, p, 0.0)

    if slice_mesh:
        start = pl.multiple_of(si * thw, 128)
        sl = pl.ds(start, thw)
    else:
        sl = slice(None)
    u = mesh_ref[0:1, sl].reshape(1, 1, thw)               # (1, 1, thw)
    v = mesh_ref[1:2, sl].reshape(1, 1, thw)               # (1, 1, thw)

    # Partial expected coordinates for this spatial chunk (VPU multiply + lane reduce).
    o_u_ref[...] += jnp.sum(p * u, axis=2, keepdims=True)  # (tb, c, 1)
    o_v_ref[...] += jnp.sum(p * v, axis=2, keepdims=True)  # (tb, c, 1)


def _pick_batch_tile(b, c):
    """Pack batch elements when c is small, but keep n_b >= 2 (v7x megacore)."""
    if c >= 8 or b <= 1:
        return 1
    for tb in (8, 4, 2):
        if b % tb == 0 and b // tb >= 2:
            return tb
    return 1


def _pick_spatial_tile(hw, c, tb, itemsize, max_tile_bytes):
    """Spatial chunk: full hw if it fits the byte budget, else a multiple of 128."""
    max_thw = max(128, (max_tile_bytes // max(1, tb * c * itemsize)) // 128 * 128)
    if hw <= max_thw:
        return hw, 1                        # single spatial block (block == full dim: legal)
    thw = max_thw
    return thw, pl.cdiv(hw, thw)            # tail block masked in-kernel (no HBM pad copy)


def spatial_softmax(x, *, max_tile_bytes=2 * 1024 * 1024):
    """x: (b, c, h, w) array (NCHW, as in PyTorch). Returns (b, c, 2) float32."""
    b, c, h, w = x.shape
    hw = h * w

    tb = _pick_batch_tile(b, c)
    thw, n_s = _pick_spatial_tile(hw, c, tb, jnp.dtype(x.dtype).itemsize, max_tile_bytes)
    n_b = b // tb
    hw_mesh = n_s * thw
    needs_mask = hw_mesh != hw

    # Coordinate table (matches torch.meshgrid(u, v) default 'ij' indexing):
    # row 0 = u = i/(h-1), row 1 = v = j/(w-1); zero-padded to the tiled extent.
    u = jnp.arange(h, dtype=jnp.float32) / (h - 1)
    v = jnp.arange(w, dtype=jnp.float32) / (w - 1)
    mesh_u, mesh_v = jnp.meshgrid(u, v, indexing="ij")
    uv = jnp.stack([mesh_u.reshape(-1), mesh_v.reshape(-1)], axis=0)      # (2, hw)
    if hw_mesh != hw:
        uv = jnp.pad(uv, ((0, 0), (0, hw_mesh - hw)))

    # Keep the tiny mesh resident in VMEM (read from HBM once) when it fits comfortably;
    # otherwise fall back to a per-chunk (2, thw) block (8 B / position, vs 512 B before).
    mesh_resident = (n_s == 1) or (hw_mesh * 64 <= 4 * 1024 * 1024)
    if mesh_resident:
        mesh_spec = pl.BlockSpec((2, hw_mesh), lambda bi, si: (0, 0))
        slice_mesh = n_s > 1
    else:
        mesh_spec = pl.BlockSpec((2, thw), lambda bi, si: (0, si))
        slice_mesh = False

    x_flat = x.reshape(b, c, hw)          # metadata reshape only; no HBM pad copy

    kernel = functools.partial(
        _spatial_softmax_kernel,
        thw=thw, hw=hw, slice_mesh=slice_mesh, needs_mask=needs_mask)

    out_u, out_v = pl.pallas_call(
        kernel,
        out_shape=(jax.ShapeDtypeStruct((b, c, 1), jnp.float32),
                   jax.ShapeDtypeStruct((b, c, 1), jnp.float32)),
        grid_spec=pltpu.PrefetchScalarGridSpec(
            num_scalar_prefetch=0,
            grid=(n_b, n_s),
            in_specs=[
                pl.BlockSpec((tb, c, thw), lambda bi, si: (bi, 0, si)),
                mesh_spec,
            ],
            out_specs=[
                pl.BlockSpec((tb, c, 1), lambda bi, si: (bi, 0, 0)),
                pl.BlockSpec((tb, c, 1), lambda bi, si: (bi, 0, 0)),
            ],
        ),
        compiler_params=pltpu.CompilerParams(
            dimension_semantics=("parallel", "arbitrary"),
            vmem_limit_bytes=48 * 1024 * 1024,
        ),
    )(x_flat, uv)

    return jnp.concatenate([out_u, out_v], axis=-1)        # (b, c, 2)


def _reference(x):
    """Pure-JAX reference matching the PyTorch forward exactly (computed in f32)."""
    b, c, h, w = x.shape
    u = jnp.arange(h, dtype=jnp.float32) / (h - 1)
    v = jnp.arange(w, dtype=jnp.float32) / (w - 1)
    mesh_u, mesh_v = jnp.meshgrid(u, v, indexing="ij")
    mesh = jnp.stack([mesh_u.reshape(-1), mesh_v.reshape(-1)], axis=1)    # (hw, 2)
    xf = x.reshape(b, c, -1).astype(jnp.float32)
    p = jax.nn.softmax(xf, axis=1)                                        # (b, c, hw)
    return jnp.einsum("bcs,sk->bck", p, mesh)                             # (b, c, 2)


if __name__ == "__main__":
    key = jax.random.PRNGKey(0)

    # Main test: the module's small reference shape, f32, single spatial block.
    b, c, h, w = 2, 4, 16, 16
    x = jax.random.normal(key, (b, c, h, w), dtype=jnp.float32)
    out = jax.block_until_ready(spatial_softmax(x))
    ref = _reference(x)
    assert out.shape == (b, c, 2), out.shape
    assert jnp.allclose(out, ref, atol=1e-5, rtol=1e-5), (
        "mismatch (f32)", float(jnp.max(jnp.abs(out - ref))))

    # Secondary test: bf16 input, non-divisible-by-128 spatial extent (native-dtype DMA path).
    key2 = jax.random.PRNGKey(1)
    b2, c2, h2, w2 = 2, 16, 48, 50
    x2 = jax.random.normal(key2, (b2, c2, h2, w2), dtype=jnp.bfloat16)
    out2 = jax.block_until_ready(spatial_softmax(x2))
    ref2 = _reference(x2)
    assert out2.shape == (b2, c2, 2), out2.shape
    assert jnp.allclose(out2, ref2, atol=2e-3, rtol=2e-3), (
        "mismatch (bf16)", float(jnp.max(jnp.abs(out2 - ref2))))

    # Third test: force spatial chunking + in-kernel tail masking + resident-mesh slicing
    # by shrinking the tile byte budget (hw = 288 -> thw = 256, n_s = 2, 32 masked tail cols).
    key3 = jax.random.PRNGKey(2)
    b3, c3, h3, w3 = 2, 4, 16, 18
    x3 = jax.random.normal(key3, (b3, c3, h3, w3), dtype=jnp.float32)
    out3 = jax.block_until_ready(spatial_softmax(x3, max_tile_bytes=4096))
    ref3 = _reference(x3)
    assert out3.shape == (b3, c3, 2), out3.shape
    assert jnp.allclose(out3, ref3, atol=1e-5, rtol=1e-5), (
        "mismatch (chunked)", float(jnp.max(jnp.abs(out3 - ref3))))

    print("KERNEL_OK")
</pallas_src>

<mosaic_0001>
module attributes {stable_mosaic.version = 11 : i64} {
  func.func @_spatial_softmax_kernel(%arg0: i32, %arg1: i32, %arg2: memref<1x4x256xf32, #tpu.memory_space<vmem>>, %arg3: memref<2x256xf32, #tpu.memory_space<vmem>>, %arg4: memref<1x4x1xf32, #tpu.memory_space<vmem>>, %arg5: memref<1x4x1xf32, #tpu.memory_space<vmem>>) attributes {dimension_semantics = [#tpu.dimension_semantics<parallel>, #tpu.dimension_semantics<arbitrary>], iteration_bounds = array<i64: 2, 1>, scalar_prefetch = 0 : i64, scratch_operands = 0 : i64, tpu.core_type = #tpu.core_type<tc>, window_params = [{transform_indices = @transform_0, window_bounds = array<i64: 1, 4, 256>}, {pipeline_mode = #tpu.pipeline_mode<synchronous>, transform_indices = @transform_1, window_bounds = array<i64: 2, 256>}, {transform_indices = @transform_2, window_bounds = array<i64: 1, 4, 1>}, {transform_indices = @transform_3, window_bounds = array<i64: 1, 4, 1>}]} {
    %c0_i32 = arith.constant 0 : i32
    %0 = arith.cmpi eq, %arg1, %c0_i32 : i32
    %1 = arith.extui %0 : i1 to i32
    %c0_i32_0 = arith.constant 0 : i32
    %2 = arith.cmpi ne, %1, %c0_i32_0 : i32
    scf.if %2 {
      %cst_21 = arith.constant 0.000000e+00 : f32
      %32 = vector.broadcast %cst_21 : f32 to vector<1x4x1xf32>
      %c0_22 = arith.constant 0 : index
      %c0_23 = arith.constant 0 : index
      %c0_24 = arith.constant 0 : index
      %33 = vector.load %arg4[%c0_22, %c0_23, %c0_24] : memref<1x4x1xf32, #tpu.memory_space<vmem>>, vector<1x4x1xf32>
      tpu.vector_store %arg4[%c0_22, %c0_23, %c0_24], %32 {strides = array<i32>} : memref<1x4x1xf32, #tpu.memory_space<vmem>>, vector<1x4x1xf32>,
      %cst_25 = arith.constant 0.000000e+00 : f32
      %34 = vector.broadcast %cst_25 : f32 to vector<1x4x1xf32>
      %c0_26 = arith.constant 0 : index
      %c0_27 = arith.constant 0 : index
      %c0_28 = arith.constant 0 : index
      %35 = vector.load %arg5[%c0_26, %c0_27, %c0_28] : memref<1x4x1xf32, #tpu.memory_space<vmem>>, vector<1x4x1xf32>
      tpu.vector_store %arg5[%c0_26, %c0_27, %c0_28], %34 {strides = array<i32>} : memref<1x4x1xf32, #tpu.memory_space<vmem>>, vector<1x4x1xf32>,
    } else {
    }
    %c0 = arith.constant 0 : index
    %c0_1 = arith.constant 0 : index
    %c0_2 = arith.constant 0 : index
    %3 = vector.load %arg2[%c0, %c0_1, %c0_2] : memref<1x4x256xf32, #tpu.memory_space<vmem>>, vector<1x4x256xf32>
    %cst = arith.constant dense<0xFF800000> : vector<1x256xf32>
    %4 = vector.multi_reduction <maximumf>, %3, %cst [1] : vector<1x4x256xf32> to vector<1x256xf32>
    %5 = vector.shape_cast %4 : vector<1x256xf32> to vector<1x1x256xf32>
    %6 = vector.broadcast %5 : vector<1x1x256xf32> to vector<1x4x256xf32>
    %7 = arith.subf %3, %6 : vector<1x4x256xf32>
    %8 = math.exp %7 : vector<1x4x256xf32>
    %cst_3 = arith.constant dense<0.000000e+00> : vector<1x256xf32>
    %9 = vector.multi_reduction <add>, %8, %cst_3 [1] : vector<1x4x256xf32> to vector<1x256xf32>
    %10 = vector.shape_cast %9 : vector<1x256xf32> to vector<1x1x256xf32>
    %11 = tpu.reciprocal %10 : vector<1x1x256xf32> -> vector<1x1x256xf32>
    %12 = vector.broadcast %11 : vector<1x1x256xf32> to vector<1x4x256xf32>
    %13 = arith.mulf %8, %12 : vector<1x4x256xf32>
    %c0_4 = arith.constant 0 : index
    %c0_5 = arith.constant 0 : index
    %14 = vector.load %arg3[%c0_4, %c0_5] : memref<2x256xf32, #tpu.memory_space<vmem>>, vector<1x256xf32>
    %15 = vector.shape_cast %14 : vector<1x256xf32> to vector<1x1x256xf32>
    %c1 = arith.constant 1 : index
    %c0_6 = arith.constant 0 : index
    %16 = vector.load %arg3[%c1, %c0_6] : memref<2x256xf32, #tpu.memory_space<vmem>>, vector<1x256xf32>
    %17 = vector.shape_cast %16 : vector<1x256xf32> to vector<1x1x256xf32>
    %c0_7 = arith.constant 0 : index
    %c0_8 = arith.constant 0 : index
    %c0_9 = arith.constant 0 : index
    %18 = vector.load %arg4[%c0_7, %c0_8, %c0_9] : memref<1x4x1xf32, #tpu.memory_space<vmem>>, vector<1x4x1xf32>
    %19 = vector.broadcast %15 : vector<1x1x256xf32> to vector<1x4x256xf32>
    %20 = arith.mulf %13, %19 : vector<1x4x256xf32>
    %cst_10 = arith.constant dense<0.000000e+00> : vector<1x4xf32>
    %21 = vector.multi_reduction <add>, %20, %cst_10 [2] : vector<1x4x256xf32> to vector<1x4xf32>
    %22 = vector.shape_cast %21 : vector<1x4xf32> to vector<1x4x1xf32>
    %23 = arith.addf %18, %22 : vector<1x4x1xf32>
    %c0_11 = arith.constant 0 : index
    %c0_12 = arith.constant 0 : index
    %c0_13 = arith.constant 0 : index
    %24 = vector.load %arg4[%c0_11, %c0_12, %c0_13] : memref<1x4x1xf32, #tpu.memory_space<vmem>>, vector<1x4x1xf32>
    tpu.vector_store %arg4[%c0_11, %c0_12, %c0_13], %23 {strides = array<i32>} : memref<1x4x1xf32, #tpu.memory_space<vmem>>, vector<1x4x1xf32>,
    %c0_14 = arith.constant 0 : index
    %c0_15 = arith.constant 0 : index
    %c0_16 = arith.constant 0 : index
    %25 = vector.load %arg5[%c0_14, %c0_15, %c0_16] : memref<1x4x1xf32, #tpu.memory_space<vmem>>, vector<1x4x1xf32>
    %26 = vector.broadcast %17 : vector<1x1x256xf32> to vector<1x4x256xf32>
    %27 = arith.mulf %13, %26 : vector<1x4x256xf32>
    %cst_17 = arith.constant dense<0.000000e+00> : vector<1x4xf32>
    %28 = vector.multi_reduction <add>, %27, %cst_17 [2] : vector<1x4x256xf32> to vector<1x4xf32>
    %29 = vector.shape_cast %28 : vector<1x4xf32> to vector<1x4x1xf32>
    %30 = arith.addf %25, %29 : vector<1x4x1xf32>
    %c0_18 = arith.constant 0 : index
    %c0_19 = arith.constant 0 : index
    %c0_20 = arith.constant 0 : index
    %31 = vector.load %arg5[%c0_18, %c0_19, %c0_20] : memref<1x4x1xf32, #tpu.memory_space<vmem>>, vector<1x4x1xf32>
    tpu.vector_store %arg5[%c0_18, %c0_19, %c0_20], %30 {strides = array<i32>} : memref<1x4x1xf32, #tpu.memory_space<vmem>>, vector<1x4x1xf32>,
    return
  }
  func.func @transform_0(%arg0: i32, %arg1: i32) -> (i32, i32, i32) {
    %c0_i32 = arith.constant 0 : i32
    %c0_i32_0 = arith.constant 0 : i32
    return %arg0, %c0_i32, %arg1 : i32, i32, i32
  }
  func.func @transform_1(%arg0: i32, %arg1: i32) -> (i32, i32) {
    %c0_i32 = arith.constant 0 : i32
    %c0_i32_0 = arith.constant 0 : i32
    %c0_i32_1 = arith.constant 0 : i32
    return %c0_i32, %c0_i32_0 : i32, i32
  }
  func.func @transform_2(%arg0: i32, %arg1: i32) -> (i32, i32, i32) {
    %c0_i32 = arith.constant 0 : i32
    %c0_i32_0 = arith.constant 0 : i32
    %c0_i32_1 = arith.constant 0 : i32
    return %arg0, %c0_i32, %c0_i32_0 : i32, i32, i32
  }
  func.func @transform_3(%arg0: i32, %arg1: i32) -> (i32, i32, i32) {
    %c0_i32 = arith.constant 0 : i32
    %c0_i32_0 = arith.constant 0 : i32
    %c0_i32_1 = arith.constant 0 : i32
    return %arg0, %c0_i32, %c0_i32_0 : i32, i32, i32
  }
}

</mosaic_0001>

<llo_original>
// kernel: tpu_custom_call.1
$region0: #{tpu_custom_call.1}
  #allocation0 [shape = 'u32[]', space=smem, size = 0x4, offset = 0x4, fixed_abs, tag = 'smem constant byte address 0x4 - core index']
  #allocation1 [shape = 'u32[144,128]{1,0:T(1,128)}', space=vmem, size = 0x12000, scoped, tag = 'internal scratch']
  %s0 = inlined_call_operand.hbm [shape: f32[2,4,256], index: 0, kind: input, shape index: {}]
  %s1 = inlined_call_operand.hbm [shape: f32[2,256], index: 1, kind: input, shape index: {}]
  %s2 = inlined_call_operand.vmem [shape: f32[2,4,1], index: 2, kind: output, shape index: {0}]
  %s3 = inlined_call_operand.vmem [shape: f32[2,4,1], index: 3, kind: output, shape index: {1}]
  %4 = xla_tuple %s2, %s3
  %s5 = sld [smem:[#allocation0]]
  $region61: #{tpu_custom_call.1} parent=0
    _
  %s7 = ssub.s32 1, %s5
  %s8 = scalar_select 0, %s7, %s5
  $region1: #{tpu_custom_call.1} parent=0
    #allocation2 [shape = 'u8[8192]{0}', space=vmem, size = 0x2000, scoped, tag = 'input window, operand 0']
    #allocation3 [shape = 's32[2]{0}', space=sflag, size = 0x8, scoped, tag = 'scoped memory for tpu_custom_call.1']
    #allocation4 [shape = 'u8[2048]{0}', space=vmem, size = 0x800, scoped, tag = 'input window, operand 1, single buffered']
    #allocation5 [shape = 's32[1]{0}', space=sflag, size = 0x4, scoped, tag = 'scoped memory for tpu_custom_call.1']
    %9 = vsyncpa [#allocation3], 0
    %s10 = scalar_lea.sflag [#allocation3], 1
    %11 = vsyncpa %s10, 0
    %12 = vsyncpa [#allocation5], 0
    loop: start=0, step=1, limit=4
    $region2: #{tpu_custom_call.1} parent=1 // loop_pre_header
      _
    $region3: #{tpu_custom_call.1} parent=1 // loop_header
      %s14 = sphi 0, %s18
      %p15 = scmp.ge.s32.totalorder %s14, 4
      %s21 = sphi 0, %s33
      %s22 = sphi 0, %s29
      %s23 = sphi 0, %s21
      %s24 = sphi 0, %s22
      %s25 = sphi 0, %s23
      %s26 = sphi 0, %s24
      %s38 = sphi 0, %s40
      %s41 = sphi 0, %s38
      %s42 = sphi 0, %s41
      %s58 = sphi 0, %s42
      %s62 = sphi 0, %s62
      %s64 = sphi 0, %s62
      %s65 = sphi 0, %s64
      %s79 = sphi 0, %s65
      %s85 = sphi 0, %s87
      %s88 = sphi 0, %s85
      %s89 = sphi 0, %s88
      %s105 = sphi 0, %s89
      %s111 = sphi 0, %s113
      %s114 = sphi 0, %s111
      %s115 = sphi 0, %s114
      %s131 = sphi 0, %s115
    $region4: #{tpu_custom_call.1} parent=1 // loop_header_branch
      %17 = sbr.rel (%p15) target = $region8
    $region5: #{tpu_custom_call.1} parent=1 // loop_body
      %s19 = ssub.s32 %s14, 1
      %s20 = ssub.s32 %s14, 2
      %s27 = sadd.s32 1, %s22
      %p28 = scmp.ge.s32.totalorder %s27, 1
      %s29 = scalar_select %p28, 0, %s27
      %s30 = sadd.s32 1, %s21
      %s31 = scalar_select %p28, %s30, %s21
      %p32 = scmp.ge.s32.totalorder %s31, 2
      %s33 = scalar_select %p32, 0, %s31
      %s34 = ssub.s32 %s21, %s33
      %s35 = ssub.s32 %s22, %s29
      %s36 = sor.u32 %s34, %s35
      %p37 = scmp.eq.s32.totalorder %s36, 0
      %s39 = sadd.s32 %s38, 1
      %s40 = scalar_select %p37, %s38, %s39
      %p43 = pneg %p37
      %p44 = scmp.eq.s32.totalorder %s14, 1
      %p45 = por %p43, %p44
      %p46 = scmp.ne.s32.totalorder %s38, %s41
      %p47 = scmp.eq.s32.totalorder %s14, 0
      %p48 = por %p46, %p47
      %p49 = scmp.ne.s32.totalorder %s38, %s41
      %p50 = scmp.eq.s32.totalorder %s19, 1
      %p51 = por %p49, %p50
      %p52 = scmp.ne.s32.totalorder %s41, %s42
      %p53 = scmp.eq.s32.totalorder %s19, 0
      %p54 = por %p52, %p53
      %p55 = scmp.ne.s32.totalorder %s41, %s42
      %p56 = scmp.eq.s32.totalorder %s20, 1
      %p57 = por %p55, %p56
      %p59 = scmp.ne.s32.totalorder %s42, %s58
      %p60 = scmp.eq.s32.totalorder %s20, 0
      %p61 = por %p59, %p60
      %s63 = sadd.s32 %s62, 1
      %p66 = scmp.eq.s32.totalorder %s14, 1
      %p67 = scmp.ne.s32.totalorder %s62, %s64
      %p68 = scmp.eq.s32.totalorder %s14, 0
      %p69 = por %p67, %p68
      %p70 = scmp.ne.s32.totalorder %s62, %s64
      %p71 = scmp.eq.s32.totalorder %s19, 1
      %p72 = por %p70, %p71
      %p73 = scmp.ne.s32.totalorder %s64, %s65
      %p74 = scmp.eq.s32.totalorder %s19, 0
      %p75 = por %p73, %p74
      %p76 = scmp.ne.s32.totalorder %s64, %s65
      %p77 = scmp.eq.s32.totalorder %s20, 1
      %p78 = por %p76, %p77
      %p80 = scmp.ne.s32.totalorder %s65, %s79
      %p81 = scmp.eq.s32.totalorder %s20, 0
      %p82 = por %p80, %p81
      %s83 = ssub.s32 %s21, %s33
      %p84 = scmp.eq.s32.totalorder %s83, 0
      %s86 = sadd.s32 %s85, 1
      %s87 = scalar_select %p84, %s85, %s86
      %p90 = pneg %p84
      %p91 = scmp.eq.s32.totalorder %s14, 1
      %p92 = por %p90, %p91
      %p93 = scmp.ne.s32.totalorder %s85, %s88
      %p94 = scmp.eq.s32.totalorder %s14, 0
      %p95 = por %p93, %p94
      %p96 = scmp.ne.s32.totalorder %s85, %s88
      %p97 = scmp.eq.s32.totalorder %s19, 1
      %p98 = por %p96, %p97
      %p99 = scmp.ne.s32.totalorder %s88, %s89
      %p100 = scmp.eq.s32.totalorder %s19, 0
      %p101 = por %p99, %p100
      %p102 = scmp.ne.s32.totalorder %s88, %s89
      %p103 = scmp.eq.s32.totalorder %s20, 1
      %p104 = por %p102, %p103
      %p106 = scmp.ne.s32.totalorder %s89, %s105
      %p107 = scmp.eq.s32.totalorder %s20, 0
      %p108 = por %p106, %p107
      %s109 = ssub.s32 %s21, %s33
      %p110 = scmp.eq.s32.totalorder %s109, 0
      %s112 = sadd.s32 %s111, 1
      %s113 = scalar_select %p110, %s111, %s112
      %p116 = pneg %p110
      %p117 = scmp.eq.s32.totalorder %s14, 1
      %p118 = por %p116, %p117
      %p119 = scmp.ne.s32.totalorder %s111, %s114
      %p120 = scmp.eq.s32.totalorder %s14, 0
      %p121 = por %p119, %p120
      %p122 = scmp.ne.s32.totalorder %s111, %s114
      %p123 = scmp.eq.s32.totalorder %s19, 1
      %p124 = por %p122, %p123
      %p125 = scmp.ne.s32.totalorder %s114, %s115
      %p126 = scmp.eq.s32.totalorder %s19, 0
      %p127 = por %p125, %p126
      %p128 = scmp.ne.s32.totalorder %s114, %s115
      %p129 = scmp.eq.s32.totalorder %s20, 1
      %p130 = por %p128, %p129
      %p132 = scmp.ne.s32.totalorder %s115, %s131
      %p133 = scmp.eq.s32.totalorder %s20, 0
      %p134 = por %p132, %p133
      %p135 = scmp.le.s32.totalorder 1, %s14
      %p136 = scmp.lt.s32.totalorder %s14, 3
      %p137 = pnand %p135, %p136
      %p138 = pneg %p137
      // Predicated region
      $region9: #{tpu_custom_call.1} parent=5 // pred_check
        _
      $region10: #{tpu_custom_call.1} parent=5 // pred_check_branch
        %140 = sbr.rel (%p137) target = $region12
      $region11: #{tpu_custom_call.1} parent=5 // pred_region
        %s141 = ssub.s32 %s14, 1
        // Predicated region
        $region13: #{tpu_custom_call.1} parent=11 // pred_check
          %p142 = pneg %p75
        $region14: #{tpu_custom_call.1} parent=11 // pred_check_branch
          %144 = sbr.rel (%p142) target = $region16
        $region15: #{tpu_custom_call.1} parent=11 // pred_region
          %s146 = ssub.s32 64, 64
          %147 = vsyncadd [#allocation5], %s146
          %s149 = sshll.u32 [#allocation4], 4
          %s150 = int_to_ptr.vmem [resolvable:$true] %s149
          %152 = dma.hbm_to_vmem [thread:$0]  %s1, 64, %s150, [#allocation5]
        $region16: #{tpu_custom_call.1} parent=11 // pred_fallthru
          _
      $region12: #{tpu_custom_call.1} parent=5 // pred_fallthru
        _
      %p153 = scmp.lt.s32.totalorder %s14, 2
      // Predicated region
      $region17: #{tpu_custom_call.1} parent=5 // pred_check
        %p154 = pneg %p153
      $region18: #{tpu_custom_call.1} parent=5 // pred_check_branch
        %156 = sbr.rel (%p154) target = $region20
      $region19: #{tpu_custom_call.1} parent=5 // pred_region
        // Predicated region
        $region21: #{tpu_custom_call.1} parent=19 // pred_check
          %p157 = pneg %p48
        $region22: #{tpu_custom_call.1} parent=19 // pred_check_branch
          %159 = sbr.rel (%p157) target = $region24
        $region23: #{tpu_custom_call.1} parent=19 // pred_region
          %s160 = sand.u32 %s38, 1
          %s161 = scalar_lea.sflag [#allocation3], %s160
          %s162 = sand.u32 %s38, 1
          %s163 = smul.addr %s162, 8
          %s164 = scalar_lea.vmem [#allocation2], %s163
          %s165 = smul.u32 2, %s22
          %s167 = ssub.s32 128, 128
          %168 = vsyncadd %s161, %s167
          %s169 = smul.addr %s21, 2
          %s170 = sadd.s32 %s165, %s169
          %s171 = smul.addr %s170, 64
          %s172 = scalar_lea.hbm %s0, %s171
          %s174 = sshll.u32 %s164, 4
          %s175 = int_to_ptr.vmem [resolvable:$true] %s174
          %177 = dma.hbm_to_vmem [thread:$0]  %s172, 128, %s175, %s161
        $region24: #{tpu_custom_call.1} parent=19 // pred_fallthru
          _
      $region20: #{tpu_custom_call.1} parent=5 // pred_fallthru
        _
      %p178 = scmp.le.s32.totalorder 1, %s14
      %p179 = scmp.lt.s32.totalorder %s14, 3
      %p180 = pnand %p178, %p179
      %p181 = pneg %p180
      // Predicated region
      $region25: #{tpu_custom_call.1} parent=5 // pred_check
        _
      $region26: #{tpu_custom_call.1} parent=5 // pred_check_branch
        %183 = sbr.rel (%p180) target = $region28
      $region27: #{tpu_custom_call.1} parent=5 // pred_region
        %s184 = ssub.s32 %s14, 1
        %s185 = sand.u32 %s41, 1
        %s186 = scalar_lea.sflag [#allocation3], %s185
        %s187 = sand.u32 %s41, 1
        %s188 = smul.addr %s187, 8
        %s189 = scalar_lea.vmem [#allocation2], %s188
        // Predicated region
        $region29: #{tpu_custom_call.1} parent=27 // pred_check
          %p190 = pneg %p54
        $region30: #{tpu_custom_call.1} parent=27 // pred_check_branch
          %192 = sbr.rel (%p190) target = $region32
        $region31: #{tpu_custom_call.1} parent=27 // pred_region
          %193 = dma.done %s186, 128
        $region32: #{tpu_custom_call.1} parent=27 // pred_fallthru
          _
        // Predicated region
        $region33: #{tpu_custom_call.1} parent=27 // pred_check
          %p194 = pneg %p75
        $region34: #{tpu_custom_call.1} parent=27 // pred_check_branch
          %196 = sbr.rel (%p194) target = $region36
        $region35: #{tpu_custom_call.1} parent=27 // pred_region
          %197 = dma.done [#allocation5], 64
        $region36: #{tpu_custom_call.1} parent=27 // pred_fallthru
          _
        %s198 = sand.u32 %s41, 1
        %s199 = scalar_lea.sflag [#allocation3], %s198
        %s200 = sand.u32 %s41, 1
        %s201 = smul.addr %s200, 8
        %s202 = scalar_lea.vmem [#allocation2], %s201
        %p203 = pneg %p54
        %p204 = pneg %p51
        %p205 = pneg %p75
        %p206 = pneg %p72
        %p207 = pneg %p101
        %p208 = pneg %p98
        %p209 = scmp.lt.s32.totalorder %s23, 1
        %s210 = scalar_select %p209, %s23, 1
        %s211 = smul.addr %s210, 4
        %s212 = scalar_lea.vmem %s2, %s211
        %p213 = pneg %p127
        %p214 = pneg %p124
        %p215 = scmp.lt.s32.totalorder %s23, 1
        %s216 = scalar_select %p215, %s23, 1
        %s217 = smul.addr %s216, 4
        %s218 = scalar_lea.vmem %s3, %s217
        %s219 = smul.u32 2, %s24
        %p220 = scmp.lt.s32.totalorder %s23, 1
        %s221 = scalar_select %p220, %s23, 1
        %s222 = smul.addr %s221, 4
        %s223 = scalar_lea.vmem %s2, %s222
        %p224 = scmp.lt.s32.totalorder %s23, 1
        %s225 = scalar_select %p224, %s23, 1
        %s226 = smul.addr %s225, 4
        %s227 = scalar_lea.vmem %s3, %s226
        %p228 = scmp.eq.s32.totalorder %s24, 0
        // Predicated region
        $region37: #{tpu_custom_call.1} parent=27 // pred_check
          %p229 = pneg %p228
        $region38: #{tpu_custom_call.1} parent=27 // pred_check_branch
          %231 = sbr.rel (%p229) target = $region40
        $region39: #{tpu_custom_call.1} parent=27 // pred_region
          %vm232 = vcmask 3072
          %233 = vst.msk [vmem:[%s223] sm:$0xf] %vm232, 0.0
          %234 = vst.msk [vmem:[%s227] sm:$0xf] %vm232, 0.0
        $region40: #{tpu_custom_call.1} parent=27 // pred_fallthru
          _
        %v235 = vld [vmem:[%s189] sm:$0xff]
        %v237 = vcombine.high %v235, %v235
        %vm239 = vcmask 1043456
        %v240 = vsel %vm239, %v235, -inf
        %v241 = vrot.slane %v240, 4
        %v242 = vmax.f32 %v240, %v241
        %v243 = vrot.slane %v242, 2
        %v244 = vmax.f32 %v242, %v243
        %v245 = vrot.slane %v244, 1
        %v246 = vmax.f32 %v244, %v245
        %v247 = vsel %vm239, %v237, -inf
        %v248 = vrot.slane %v247, 4
        %v249 = vmax.f32 %v247, %v248
        %v250 = vrot.slane %v249, 2
        %v251 = vmax.f32 %v249, %v250
        %v252 = vrot.slane %v251, 1
        %v253 = vmax.f32 %v251, %v252
        %v256 = vcombine.low %v246, %v253
        %v258 = vsub.f32 %v235, %v256
        %v259 = vmul.f32 %v258, 1.442695
        %v260 = vpow.pop %v259
        %v262 = vcombine.high %v260, %v260
        %v264 = vsel %vm239, %v260, 0.0
        %v265 = vrot.slane %v264, 4
        %v266 = vadd.f32 %v264, %v265
        %v267 = vrot.slane %v266, 2
        %v268 = vadd.f32 %v266, %v267
        %v269 = vrot.slane %v268, 1
        %v270 = vadd.f32 %v268, %v269
        %v271 = vsel %vm239, %v262, 0.0
        %v272 = vrot.slane %v271, 4
        %v273 = vadd.f32 %v271, %v272
        %v274 = vrot.slane %v273, 2
        %v275 = vadd.f32 %v273, %v274
        %v276 = vrot.slane %v275, 1
        %v277 = vadd.f32 %v275, %v276
        %v278 = vrcp.pop %v270
        %v279 = vrcp.pop %v277
        %v282 = vcombine.low %v278, %v279
        %v284 = vmul.f32 %v260, %v282
        %v285 = vld [vmem:[#allocation4] ss:$2 sm:$0x3]
        %s286 = scalar_lea.vmem [#allocation4], 1
        %v287 = vld [vmem:[%s286] ss:$2 sm:$0x3]
        %v288 = vld [vmem:[%s223] sm:$0xf]
        %v290 = vlaneseq
        %v291 = vshrl.u32 %v290, 7
        %v292 = vsub.s32 0, %v291
        %v293 = vrot.slane %v285, %v292
        %v294 = vlaneseq
        %v295 = vshrl.u32 %v294, 7
        %v296 = vsub.s32 1, %v295
        %v297 = vrot.slane %v285, %v296
        %v298 = vcombine.low %v293, %v297
        %v300 = vmul.f32 %v284, %v298
        %v302 = vcombine.high %v300, %v300
        %v304 = vsel %vm239, %v300, 0.0
        %v305 = vsel %vm239, %v302, 0.0
        %v306 = vadd.f32 %v304, %v305
        %307 = vadd.xlane.f32.xlu0 %v306
        %v308 = vpop.xlane.xlu0 %307
        %v309 = vadd.f32 %v288, %v308
        %vm310 = vcmask 3072
        %311 = vst.msk [vmem:[%s223] sm:$0xf] %vm310, %v309
        %v312 = vld [vmem:[%s227] sm:$0xf]
        %v314 = vlaneseq
        %v315 = vshrl.u32 %v314, 7
        %v316 = vsub.s32 0, %v315
        %v317 = vrot.slane %v287, %v316
        %v318 = vlaneseq
        %v319 = vshrl.u32 %v318, 7
        %v320 = vsub.s32 1, %v319
        %v321 = vrot.slane %v287, %v320
        %v322 = vcombine.low %v317, %v321
        %v324 = vmul.f32 %v284, %v322
        %v326 = vcombine.high %v324, %v324
        %v328 = vsel %vm239, %v324, 0.0
        %v329 = vsel %vm239, %v326, 0.0
        %v330 = vadd.f32 %v328, %v329
        %331 = vadd.xlane.f32.xlu0 %v330
        %v332 = vpop.xlane.xlu0 %331
        %v333 = vadd.f32 %v312, %v332
        %334 = vst.msk [vmem:[%s227] sm:$0xf] %vm310, %v333
        %p335 = scmp.lt.s32.totalorder %s23, 1
        %s336 = scalar_select %p335, %s23, 1
        %s337 = smul.addr %s336, 4
        %s338 = scalar_lea.vmem %s2, %s337
        %p339 = scmp.lt.s32.totalorder %s23, 1
        %s340 = scalar_select %p339, %s23, 1
        %s341 = smul.addr %s340, 4
        %s342 = scalar_lea.vmem %s3, %s341
        // Predicated region
        $region41: #{tpu_custom_call.1} parent=27 // pred_check
          %p343 = pneg %p98
        $region42: #{tpu_custom_call.1} parent=27 // pred_check_branch
          %345 = sbr.rel (%p343) target = $region44
        $region43: #{tpu_custom_call.1} parent=27 // pred_region
          _
        $region44: #{tpu_custom_call.1} parent=27 // pred_fallthru
          _
        // Predicated region
        $region45: #{tpu_custom_call.1} parent=27 // pred_check
          %p346 = pneg %p124
        $region46: #{tpu_custom_call.1} parent=27 // pred_check_branch
          %348 = sbr.rel (%p346) target = $region48
        $region47: #{tpu_custom_call.1} parent=27 // pred_region
          _
        $region48: #{tpu_custom_call.1} parent=27 // pred_fallthru
          _
      $region28: #{tpu_custom_call.1} parent=5 // pred_fallthru
        _
      %p349 = scmp.le.s32.totalorder 2, %s14
      // Predicated region
      $region49: #{tpu_custom_call.1} parent=5 // pred_check
        %p350 = pneg %p349
      $region50: #{tpu_custom_call.1} parent=5 // pred_check_branch
        %352 = sbr.rel (%p350) target = $region52
      $region51: #{tpu_custom_call.1} parent=5 // pred_region
        %s353 = ssub.s32 %s14, 2
        // Predicated region
        $region53: #{tpu_custom_call.1} parent=51 // pred_check
          %p354 = pneg %p104
        $region54: #{tpu_custom_call.1} parent=51 // pred_check_branch
          %356 = sbr.rel (%p354) target = $region56
        $region55: #{tpu_custom_call.1} parent=51 // pred_region
          %p357 = scmp.lt.s32.totalorder %s25, 1
          %s358 = scalar_select %p357, %s25, 1
          %s359 = smul.addr %s358, 4
          %s360 = scalar_lea.vmem %s2, %s359
        $region56: #{tpu_custom_call.1} parent=51 // pred_fallthru
          _
        // Predicated region
        $region57: #{tpu_custom_call.1} parent=51 // pred_check
          %p361 = pneg %p130
        $region58: #{tpu_custom_call.1} parent=51 // pred_check_branch
          %363 = sbr.rel (%p361) target = $region60
        $region59: #{tpu_custom_call.1} parent=51 // pred_region
          %p364 = scmp.lt.s32.totalorder %s25, 1
          %s365 = scalar_select %p364, %s25, 1
          %s366 = smul.addr %s365, 4
          %s367 = scalar_lea.vmem %s3, %s366
        $region60: #{tpu_custom_call.1} parent=51 // pred_fallthru
          _
      $region52: #{tpu_custom_call.1} parent=5 // pred_fallthru
        _
    $region6: #{tpu_custom_call.1} parent=1 // loop_footer
      %s18 = sadd.s32 1, %s14
    $region7: #{tpu_custom_call.1} parent=1 // loop_footer_branch
      %13 = sbr.rel target = $region3
    $region8: #{tpu_custom_call.1} parent=1 // loop_exit
      _
    %368 = vsyncpa [#allocation3], 1
    %s369 = scalar_lea.sflag [#allocation3], 1
    %370 = vsyncpa %s369, 1
    %371 = vsyncpa [#allocation5], 1

</llo_original>
